<compile_context>
chip_gen: v5e
topology: v5e:2x2
jax: 0.10.0
libtpu: 0.0.40
codegen_flags: <defaults>
</compile_context>

<pallas_src>
import functools

import jax
import jax.numpy as jnp
from jax.experimental import pallas as pl
from jax.experimental.pallas import tpu as pltpu

_LANE = 128
_SUBLANE = 8


def _round_up(x, m):
    return ((x + m - 1) // m) * m


def _batch_tiling(B, batch_tile):
    """Pick the lane-axis (batch) tile size and grid length.

    Either a single block whose lane dim equals the full batch (layout-legal
    for any B), or multiple-of-128 tiles with a ragged last tile that Pallas
    masks on writeback.  Guarantees >= 2 grid steps once the batch spans more
    than one 128-lane tile, so v7x can shard the "parallel" axis over its two
    TensorCores (no-op on v5e/v6e).
    """
    if B <= _LANE:
        return B, 1
    bt = _round_up(B, _LANE)
    tb = min(_round_up(batch_tile, _LANE), bt)
    if bt // tb < 2:
        tb = max(_LANE, _round_up(bt // 2, _LANE))
    return tb, pl.cdiv(B, tb)


def _mlp_kernel(xt_ref, w1_ref, b1_ref, w2_ref, b2_ref, w3_ref, b3_ref, out_ref):
    """Transposed fused MLP; batch lives on the lane axis.

    xt_ref : (state_dim, tb) f32   -- one batch tile of x^T (cast to bf16 here)
    w*_ref : (out_dim, in_dim) bf16 -- VMEM-resident across all batch tiles
    b*_ref : (out_dim, 1) f32
    out_ref: (a_pad, tb) f32       -- lane-dense, tiny writeback (a_pad = 8)
    """
    xt = xt_ref[...].astype(jnp.bfloat16)

    h1 = jnp.dot(w1_ref[...], xt, preferred_element_type=jnp.float32) + b1_ref[...]
    h1 = jnp.maximum(h1, 0.0)

    h2 = jnp.dot(w2_ref[...], h1.astype(jnp.bfloat16),
                 preferred_element_type=jnp.float32) + b2_ref[...]
    h2 = jnp.maximum(h2, 0.0)

    y = jnp.dot(w3_ref[...], h2.astype(jnp.bfloat16),
                preferred_element_type=jnp.float32) + b3_ref[...]
    out_ref[...] = y


def prepare_params(params):
    """One-time parameter prep (do NOT call per forward step).

    Converts (in, out) f32 weights / (1, out) f32 biases into the kernel's
    transposed layout: (out, in) bf16 weights, (out, 1) f32 biases, with the
    final layer's output rows zero-padded up to a sublane multiple (8).
    Returns (prepped_params, action_dim).
    """
    w1, b1, w2, b2, w3, b3 = params
    action_dim = w3.shape[1]
    a_pad = _round_up(max(action_dim, _SUBLANE), _SUBLANE)

    wt1 = jnp.asarray(w1.T, jnp.bfloat16)                      # (h1, state_dim)
    wt2 = jnp.asarray(w2.T, jnp.bfloat16)                      # (h2, h1)
    wt3 = jnp.zeros((a_pad, w3.shape[0]), jnp.bfloat16).at[:action_dim, :].set(
        w3.T.astype(jnp.bfloat16))                             # (8, h2)

    bt1 = jnp.asarray(b1.reshape(-1, 1), jnp.float32)          # (h1, 1)
    bt2 = jnp.asarray(b2.reshape(-1, 1), jnp.float32)          # (h2, 1)
    bt3 = jnp.zeros((a_pad, 1), jnp.float32).at[:action_dim, 0].set(
        b3.reshape(-1).astype(jnp.float32))                    # (8, 1)

    return (wt1, bt1, wt2, bt2, wt3, bt3), action_dim


@functools.partial(jax.jit, static_argnames=("action_dim", "batch_tile"))
def net_forward(x, prepped, *, action_dim, batch_tile=1024):
    """Fused MLP forward. x: (B, state_dim) f32. Returns (B, action_dim) f32."""
    wt1, bt1, wt2, bt2, wt3, bt3 = prepped
    B, state_dim = x.shape
    h1_dim = wt1.shape[0]
    h2_dim = wt2.shape[0]
    a_pad = wt3.shape[0]

    # Layout plumbing only: batch goes on the lane axis inside the kernel.
    xt = x.T  # (state_dim, B) f32; bf16 cast happens in-kernel

    tb, n_tiles = _batch_tiling(B, batch_tile)
    grid = (n_tiles,)

    flops = 2 * n_tiles * tb * (state_dim * h1_dim + h1_dim * h2_dim + h2_dim * a_pad)
    bytes_accessed = (
        xt.size * 4
        + wt1.size * 2 + wt2.size * 2 + wt3.size * 2
        + bt1.size * 4 + bt2.size * 4 + bt3.size * 4
        + a_pad * B * 4)

    out_t = pl.pallas_call(
        _mlp_kernel,
        out_shape=jax.ShapeDtypeStruct((a_pad, B), jnp.float32),
        grid_spec=pltpu.PrefetchScalarGridSpec(
            num_scalar_prefetch=0,
            grid=grid,
            in_specs=[
                # x^T: tiled along the lane (batch) axis; ragged last tile OK.
                pl.BlockSpec((state_dim, tb), lambda i: (0, i)),
                # weights / biases: constant block index -> DMA'd once,
                # VMEM-resident across all batch tiles.
                pl.BlockSpec(wt1.shape, lambda i: (0, 0)),
                pl.BlockSpec(bt1.shape, lambda i: (0, 0)),
                pl.BlockSpec(wt2.shape, lambda i: (0, 0)),
                pl.BlockSpec(bt2.shape, lambda i: (0, 0)),
                pl.BlockSpec(wt3.shape, lambda i: (0, 0)),
                pl.BlockSpec(bt3.shape, lambda i: (0, 0)),
            ],
            out_specs=pl.BlockSpec((a_pad, tb), lambda i: (0, i)),
        ),
        compiler_params=pltpu.CompilerParams(
            dimension_semantics=("parallel",)),
        cost_estimate=pl.CostEstimate(
            flops=flops, transcendentals=0, bytes_accessed=bytes_accessed),
    )(xt, wt1, bt1, wt2, bt2, wt3, bt3)

    return out_t[:action_dim, :].T


def init_params(key, state_dim, action_dim, hidden_size=(256, 256)):
    """Mirror the PyTorch module init: weights ~ N(0, 0.1); biases ~ U(+-1/sqrt(fan_in))
    (PyTorch nn.Linear default bias init).  Stored (in, out) so y = x @ W + b."""
    k = jax.random.split(key, 6)
    h1, h2 = hidden_size

    def w(kk, fan_in, fan_out):
        return 0.1 * jax.random.normal(kk, (fan_in, fan_out), jnp.float32)

    def b(kk, fan_in, fan_out):
        bound = 1.0 / jnp.sqrt(fan_in)
        return jax.random.uniform(kk, (1, fan_out), jnp.float32, -bound, bound)

    w1 = w(k[0], state_dim, h1)
    b1 = b(k[1], state_dim, h1)
    w2 = w(k[2], h1, h2)
    b2 = b(k[3], h1, h2)
    w3 = w(k[4], h2, action_dim)
    b3 = b(k[5], h2, action_dim)
    return (w1, b1, w2, b2, w3, b3)


def reference_forward_matched(x, params):
    """Reference with the same bf16-operand / f32-accumulate precision as the kernel."""
    w1, b1, w2, b2, w3, b3 = params
    cd = jnp.bfloat16
    h1 = jnp.maximum(
        jnp.dot(x.astype(cd), w1.astype(cd), preferred_element_type=jnp.float32) + b1, 0.0)
    h2 = jnp.maximum(
        jnp.dot(h1.astype(cd), w2.astype(cd), preferred_element_type=jnp.float32) + b2, 0.0)
    return jnp.dot(h2.astype(cd), w3.astype(cd), preferred_element_type=jnp.float32) + b3


def reference_forward_f32(x, params):
    w1, b1, w2, b2, w3, b3 = params
    h1 = jnp.maximum(x @ w1 + b1, 0.0)
    h2 = jnp.maximum(h1 @ w2 + b2, 0.0)
    return h2 @ w3 + b3


# TODO(synk): select_action's epsilon-greedy branch (host-side random/numpy) has no
# kernel equivalent; argmax over the returned Q-values is done by the caller.


if __name__ == "__main__":
    # Small shapes consistent with the module's forward (batch of states).
    batch, state_dim, action_dim = 2, 16, 4
    hidden_size = (256, 256)  # PyTorch module default

    key = jax.random.PRNGKey(0)
    pkey, xkey, xkey2 = jax.random.split(key, 3)
    params = init_params(pkey, state_dim, action_dim, hidden_size)

    # One-time parameter prep (off the per-step path).
    prepped, adim = prepare_params(params)
    prepped = jax.block_until_ready(prepped)

    x = jax.random.normal(xkey, (batch, state_dim), jnp.float32)
    out = net_forward(x, prepped, action_dim=adim)
    out = jax.block_until_ready(out)
    assert out.shape == (batch, action_dim)

    ref_matched = reference_forward_matched(x, params)
    assert jnp.allclose(out, ref_matched, atol=1e-3, rtol=1e-3), \
        "mismatch vs bf16-matched reference"

    ref_f32 = reference_forward_f32(x, params)
    assert jnp.allclose(out, ref_f32, atol=5e-2, rtol=5e-2), \
        "mismatch vs f32 reference"

    # Larger, non-multiple batch: exercises the multi-tile + ragged-last-tile path.
    x2 = jax.random.normal(xkey2, (200, state_dim), jnp.float32)
    out2 = jax.block_until_ready(net_forward(x2, prepped, action_dim=adim))
    assert out2.shape == (200, action_dim)
    ref2 = reference_forward_matched(x2, params)
    assert jnp.allclose(out2, ref2, atol=1e-3, rtol=1e-3), \
        "mismatch vs bf16-matched reference (tiled batch)"

    print("KERNEL_OK")
</pallas_src>

<mosaic_0001>
module attributes {stable_mosaic.version = 11 : i64} {
  func.func @_mlp_kernel(%arg0: i32, %arg1: memref<16x2xf32, #tpu.memory_space<vmem>>, %arg2: memref<256x16xbf16, #tpu.memory_space<vmem>>, %arg3: memref<256x1xf32, #tpu.memory_space<vmem>>, %arg4: memref<256x256xbf16, #tpu.memory_space<vmem>>, %arg5: memref<256x1xf32, #tpu.memory_space<vmem>>, %arg6: memref<8x256xbf16, #tpu.memory_space<vmem>>, %arg7: memref<8x1xf32, #tpu.memory_space<vmem>>, %arg8: memref<8x2xf32, #tpu.memory_space<vmem>>) attributes {dimension_semantics = [#tpu.dimension_semantics<parallel>], iteration_bounds = array<i64: 1>, scalar_prefetch = 0 : i64, scratch_operands = 0 : i64, tpu.core_type = #tpu.core_type<tc>, window_params = [{transform_indices = @transform_0, window_bounds = array<i64: 16, 2>}, {pipeline_mode = #tpu.pipeline_mode<synchronous>, transform_indices = @transform_1, window_bounds = array<i64: 256, 16>}, {pipeline_mode = #tpu.pipeline_mode<synchronous>, transform_indices = @transform_2, window_bounds = array<i64: 256, 1>}, {pipeline_mode = #tpu.pipeline_mode<synchronous>, transform_indices = @transform_3, window_bounds = array<i64: 256, 256>}, {pipeline_mode = #tpu.pipeline_mode<synchronous>, transform_indices = @transform_4, window_bounds = array<i64: 256, 1>}, {pipeline_mode = #tpu.pipeline_mode<synchronous>, transform_indices = @transform_5, window_bounds = array<i64: 8, 256>}, {pipeline_mode = #tpu.pipeline_mode<synchronous>, transform_indices = @transform_6, window_bounds = array<i64: 8, 1>}, {transform_indices = @transform_7, window_bounds = array<i64: 8, 2>}]} {
    %c0 = arith.constant 0 : index
    %c0_0 = arith.constant 0 : index
    %0 = vector.load %arg1[%c0, %c0_0] : memref<16x2xf32, #tpu.memory_space<vmem>>, vector<16x2xf32>
    %1 = arith.truncf %0 : vector<16x2xf32> to vector<16x2xbf16>
    %c0_1 = arith.constant 0 : index
    %c0_2 = arith.constant 0 : index
    %2 = vector.load %arg2[%c0_1, %c0_2] : memref<256x16xbf16, #tpu.memory_space<vmem>>, vector<256x16xbf16>
    %cst = arith.constant dense<0.000000e+00> : vector<256x2xf32>
    %3 = tpu.matmul %2, %1, %cst {dimension_numbers = #tpu.dot_dimension_numbers<[1], [0], [0], [1], [0, 0, 1, 1], [], []>} : vector<256x16xbf16>, vector<16x2xbf16>, vector<256x2xf32> -> vector<256x2xf32>
    %c0_3 = arith.constant 0 : index
    %c0_4 = arith.constant 0 : index
    %4 = vector.load %arg3[%c0_3, %c0_4] : memref<256x1xf32, #tpu.memory_space<vmem>>, vector<256x1xf32>
    %5 = vector.broadcast %4 : vector<256x1xf32> to vector<256x2xf32>
    %6 = arith.addf %3, %5 : vector<256x2xf32>
    %cst_5 = arith.constant 0.000000e+00 : f32
    %7 = vector.broadcast %cst_5 : f32 to vector<256x2xf32>
    %8 = arith.maximumf %6, %7 : vector<256x2xf32>
    %c0_6 = arith.constant 0 : index
    %c0_7 = arith.constant 0 : index
    %9 = vector.load %arg4[%c0_6, %c0_7] : memref<256x256xbf16, #tpu.memory_space<vmem>>, vector<256x256xbf16>
    %10 = arith.truncf %8 : vector<256x2xf32> to vector<256x2xbf16>
    %cst_8 = arith.constant dense<0.000000e+00> : vector<256x2xf32>
    %11 = tpu.matmul %9, %10, %cst_8 {dimension_numbers = #tpu.dot_dimension_numbers<[1], [0], [0], [1], [0, 0, 1, 1], [], []>} : vector<256x256xbf16>, vector<256x2xbf16>, vector<256x2xf32> -> vector<256x2xf32>
    %c0_9 = arith.constant 0 : index
    %c0_10 = arith.constant 0 : index
    %12 = vector.load %arg5[%c0_9, %c0_10] : memref<256x1xf32, #tpu.memory_space<vmem>>, vector<256x1xf32>
    %13 = vector.broadcast %12 : vector<256x1xf32> to vector<256x2xf32>
    %14 = arith.addf %11, %13 : vector<256x2xf32>
    %cst_11 = arith.constant 0.000000e+00 : f32
    %15 = vector.broadcast %cst_11 : f32 to vector<256x2xf32>
    %16 = arith.maximumf %14, %15 : vector<256x2xf32>
    %c0_12 = arith.constant 0 : index
    %c0_13 = arith.constant 0 : index
    %17 = vector.load %arg6[%c0_12, %c0_13] : memref<8x256xbf16, #tpu.memory_space<vmem>>, vector<8x256xbf16>
    %18 = arith.truncf %16 : vector<256x2xf32> to vector<256x2xbf16>
    %cst_14 = arith.constant dense<0.000000e+00> : vector<8x2xf32>
    %19 = tpu.matmul %17, %18, %cst_14 {dimension_numbers = #tpu.dot_dimension_numbers<[1], [0], [0], [1], [0, 0, 1, 1], [], []>} : vector<8x256xbf16>, vector<256x2xbf16>, vector<8x2xf32> -> vector<8x2xf32>
    %c0_15 = arith.constant 0 : index
    %c0_16 = arith.constant 0 : index
    %20 = vector.load %arg7[%c0_15, %c0_16] : memref<8x1xf32, #tpu.memory_space<vmem>>, vector<8x1xf32>
    %21 = vector.broadcast %20 : vector<8x1xf32> to vector<8x2xf32>
    %22 = arith.addf %19, %21 : vector<8x2xf32>
    %c0_17 = arith.constant 0 : index
    %c0_18 = arith.constant 0 : index
    %23 = vector.load %arg8[%c0_17, %c0_18] : memref<8x2xf32, #tpu.memory_space<vmem>>, vector<8x2xf32>
    tpu.vector_store %arg8[%c0_17, %c0_18], %22 {strides = array<i32>} : memref<8x2xf32, #tpu.memory_space<vmem>>, vector<8x2xf32>,
    return
  }
  func.func @transform_0(%arg0: i32) -> (i32, i32) {
    %c0_i32 = arith.constant 0 : i32
    %c0_i32_0 = arith.constant 0 : i32
    return %c0_i32, %arg0 : i32, i32
  }
  func.func @transform_1(%arg0: i32) -> (i32, i32) {
    %c0_i32 = arith.constant 0 : i32
    %c0_i32_0 = arith.constant 0 : i32
    %c0_i32_1 = arith.constant 0 : i32
    return %c0_i32, %c0_i32_0 : i32, i32
  }
  func.func @transform_2(%arg0: i32) -> (i32, i32) {
    %c0_i32 = arith.constant 0 : i32
    %c0_i32_0 = arith.constant 0 : i32
    %c0_i32_1 = arith.constant 0 : i32
    return %c0_i32, %c0_i32_0 : i32, i32
  }
  func.func @transform_3(%arg0: i32) -> (i32, i32) {
    %c0_i32 = arith.constant 0 : i32
    %c0_i32_0 = arith.constant 0 : i32
    %c0_i32_1 = arith.constant 0 : i32
    return %c0_i32, %c0_i32_0 : i32, i32
  }
  func.func @transform_4(%arg0: i32) -> (i32, i32) {
    %c0_i32 = arith.constant 0 : i32
    %c0_i32_0 = arith.constant 0 : i32
    %c0_i32_1 = arith.constant 0 : i32
    return %c0_i32, %c0_i32_0 : i32, i32
  }
  func.func @transform_5(%arg0: i32) -> (i32, i32) {
    %c0_i32 = arith.constant 0 : i32
    %c0_i32_0 = arith.constant 0 : i32
    %c0_i32_1 = arith.constant 0 : i32
    return %c0_i32, %c0_i32_0 : i32, i32
  }
  func.func @transform_6(%arg0: i32) -> (i32, i32) {
    %c0_i32 = arith.constant 0 : i32
    %c0_i32_0 = arith.constant 0 : i32
    %c0_i32_1 = arith.constant 0 : i32
    return %c0_i32, %c0_i32_0 : i32, i32
  }
  func.func @transform_7(%arg0: i32) -> (i32, i32) {
    %c0_i32 = arith.constant 0 : i32
    %c0_i32_0 = arith.constant 0 : i32
    return %c0_i32, %arg0 : i32, i32
  }
}

</mosaic_0001>

<llo_original>
// kernel: net_forward.1
$region0: #{net_forward.1}
  #allocation0 [shape = 'u32[]', space=smem, size = 0x4, offset = 0x4, fixed_abs, tag = 'smem constant byte address 0x4 - core index']
  #allocation1 [shape = 'u32[72,128]{1,0:T(1,128)}', space=vmem, size = 0x9000, scoped, tag = 'internal scratch']
  %s0 = inlined_call_operand.vmem [shape: f32[16,2], index: 0, kind: input, shape index: {}]
  %s1 = inlined_call_operand.vmem [shape: bf16[256,16], index: 1, kind: input, shape index: {}]
  %s2 = inlined_call_operand.vmem [shape: f32[256,1], index: 2, kind: input, shape index: {}]
  %s3 = inlined_call_operand.vmem [shape: bf16[256,256], index: 3, kind: input, shape index: {}]
  %s4 = inlined_call_operand.vmem [shape: f32[256,1], index: 4, kind: input, shape index: {}]
  %s5 = inlined_call_operand.vmem [shape: bf16[8,256], index: 5, kind: input, shape index: {}]
  %s6 = inlined_call_operand.vmem [shape: f32[8,1], index: 6, kind: input, shape index: {}]
  %s7 = inlined_call_operand.vmem [shape: f32[8,2], index: 7, kind: output, shape index: {}]
  %s8 = sld [smem:[#allocation0]]
  $region38: #{net_forward.1} parent=0
    _
  %s10 = ssub.s32 1, %s8
  %s11 = scalar_select 0, %s10, %s8
  // Predicated region
  $region2: #{net_forward.1} parent=0 // pred_check
    _
  $region3: #{net_forward.1} parent=0 // pred_check_branch
    %13 = sbr.rel (0) target = $region5
  $region4: #{net_forward.1} parent=0 // pred_region
    _
  $region5: #{net_forward.1} parent=0 // pred_fallthru
    _
  // Predicated region
  $region6: #{net_forward.1} parent=0 // pred_check
    _
  $region7: #{net_forward.1} parent=0 // pred_check_branch
    %15 = sbr.rel (0) target = $region9
  $region8: #{net_forward.1} parent=0 // pred_region
    _
  $region9: #{net_forward.1} parent=0 // pred_fallthru
    _
  // Predicated region
  $region10: #{net_forward.1} parent=0 // pred_check
    _
  $region11: #{net_forward.1} parent=0 // pred_check_branch
    %17 = sbr.rel (0) target = $region13
  $region12: #{net_forward.1} parent=0 // pred_region
    _
  $region13: #{net_forward.1} parent=0 // pred_fallthru
    _
  // Predicated region
  $region14: #{net_forward.1} parent=0 // pred_check
    _
  $region15: #{net_forward.1} parent=0 // pred_check_branch
    %19 = sbr.rel (0) target = $region17
  $region16: #{net_forward.1} parent=0 // pred_region
    _
  $region17: #{net_forward.1} parent=0 // pred_fallthru
    _
  // Predicated region
  $region18: #{net_forward.1} parent=0 // pred_check
    _
  $region19: #{net_forward.1} parent=0 // pred_check_branch
    %21 = sbr.rel (0) target = $region21
  $region20: #{net_forward.1} parent=0 // pred_region
    _
  $region21: #{net_forward.1} parent=0 // pred_fallthru
    _
  // Predicated region
  $region22: #{net_forward.1} parent=0 // pred_check
    _
  $region23: #{net_forward.1} parent=0 // pred_check_branch
    %23 = sbr.rel (0) target = $region25
  $region24: #{net_forward.1} parent=0 // pred_region
    _
  $region25: #{net_forward.1} parent=0 // pred_fallthru
    _
  // Predicated region
  $region26: #{net_forward.1} parent=0 // pred_check
    _
  $region27: #{net_forward.1} parent=0 // pred_check_branch
    %25 = sbr.rel (0) target = $region29
  $region28: #{net_forward.1} parent=0 // pred_region
    _
  $region29: #{net_forward.1} parent=0 // pred_fallthru
    _
  %v27 = vld [vmem:[%s0] sm:$0xff]
  %v28 = vld [vmem:[%s0 + $0x8] sm:$0xff]
  %v29 = vpack.c.bf16 %v28, %v27
  %v30 = vld [vmem:[%s1] sm:$0xf]
  %v31 = vld [vmem:[%s1 + $0x4] sm:$0xf]
  %v32 = vld [vmem:[%s1 + $0x8] sm:$0xf]
  %v33 = vld [vmem:[%s1 + $0xc] sm:$0xf]
  %v34 = vld [vmem:[%s1 + $0x10] sm:$0xf]
  %v35 = vld [vmem:[%s1 + $0x14] sm:$0xf]
  %v36 = vld [vmem:[%s1 + $0x18] sm:$0xf]
  %v37 = vld [vmem:[%s1 + $0x1c] sm:$0xf]
  %v38 = vld [vmem:[%s1 + $0x20] sm:$0xf]
  %v39 = vld [vmem:[%s1 + $0x24] sm:$0xf]
  %v40 = vld [vmem:[%s1 + $0x28] sm:$0xf]
  %v41 = vld [vmem:[%s1 + $0x2c] sm:$0xf]
  %v42 = vld [vmem:[%s1 + $0x30] sm:$0xf]
  %v43 = vld [vmem:[%s1 + $0x34] sm:$0xf]
  %v44 = vld [vmem:[%s1 + $0x38] sm:$0xf]
  %v45 = vld [vmem:[%s1 + $0x3c] sm:$0xf]
  %v46 = vld [vmem:[%s1 + $0x40] sm:$0xf]
  %v47 = vld [vmem:[%s1 + $0x44] sm:$0xf]
  %v48 = vld [vmem:[%s1 + $0x48] sm:$0xf]
  %v49 = vld [vmem:[%s1 + $0x4c] sm:$0xf]
  %v50 = vld [vmem:[%s1 + $0x50] sm:$0xf]
  %v51 = vld [vmem:[%s1 + $0x54] sm:$0xf]
  %v52 = vld [vmem:[%s1 + $0x58] sm:$0xf]
  %v53 = vld [vmem:[%s1 + $0x5c] sm:$0xf]
  %v54 = vld [vmem:[%s1 + $0x60] sm:$0xf]
  %v55 = vld [vmem:[%s1 + $0x64] sm:$0xf]
  %v56 = vld [vmem:[%s1 + $0x68] sm:$0xf]
  %v57 = vld [vmem:[%s1 + $0x6c] sm:$0xf]
  %v58 = vld [vmem:[%s1 + $0x70] sm:$0xf]
  %v59 = vld [vmem:[%s1 + $0x74] sm:$0xf]
  %v60 = vld [vmem:[%s1 + $0x78] sm:$0xf]
  %v61 = vld [vmem:[%s1 + $0x7c] sm:$0xf]
  %v62 = vld [vmem:[%s2] sm:$0xff]
  %v63 = vld [vmem:[%s2 + $0x8] sm:$0xff]
  %v64 = vld [vmem:[%s2 + $0x10] sm:$0xff]
  %v65 = vld [vmem:[%s2 + $0x18] sm:$0xff]
  %v66 = vld [vmem:[%s2 + $0x20] sm:$0xff]
  %v67 = vld [vmem:[%s2 + $0x28] sm:$0xff]
  %v68 = vld [vmem:[%s2 + $0x30] sm:$0xff]
  %v69 = vld [vmem:[%s2 + $0x38] sm:$0xff]
  %v70 = vld [vmem:[%s2 + $0x40] sm:$0xff]
  %v71 = vld [vmem:[%s2 + $0x48] sm:$0xff]
  %v72 = vld [vmem:[%s2 + $0x50] sm:$0xff]
  %v73 = vld [vmem:[%s2 + $0x58] sm:$0xff]
  %v74 = vld [vmem:[%s2 + $0x60] sm:$0xff]
  %v75 = vld [vmem:[%s2 + $0x68] sm:$0xff]
  %v76 = vld [vmem:[%s2 + $0x70] sm:$0xff]
  %v77 = vld [vmem:[%s2 + $0x78] sm:$0xff]
  %v78 = vld [vmem:[%s2 + $0x80] sm:$0xff]
  %v79 = vld [vmem:[%s2 + $0x88] sm:$0xff]
  %v80 = vld [vmem:[%s2 + $0x90] sm:$0xff]
  %v81 = vld [vmem:[%s2 + $0x98] sm:$0xff]
  %v82 = vld [vmem:[%s2 + $0xa0] sm:$0xff]
  %v83 = vld [vmem:[%s2 + $0xa8] sm:$0xff]
  %v84 = vld [vmem:[%s2 + $0xb0] sm:$0xff]
  %v85 = vld [vmem:[%s2 + $0xb8] sm:$0xff]
  %v86 = vld [vmem:[%s2 + $0xc0] sm:$0xff]
  %v87 = vld [vmem:[%s2 + $0xc8] sm:$0xff]
  %v88 = vld [vmem:[%s2 + $0xd0] sm:$0xff]
  %v89 = vld [vmem:[%s2 + $0xd8] sm:$0xff]
  %v90 = vld [vmem:[%s2 + $0xe0] sm:$0xff]
  %v91 = vld [vmem:[%s2 + $0xe8] sm:$0xff]
  %v92 = vld [vmem:[%s2 + $0xf0] sm:$0xff]
  %v93 = vld [vmem:[%s2 + $0xf8] sm:$0xff]
  %95 = vset.pattern.permute.xlu0 0
  %96 = vperm.xlu0 %95, %v62
  %v97 = vpop.permute.xlu0 %96
  %100 = vset.pattern.permute.xlu0 0
  %101 = vperm.xlu0 %100, %v63
  %v102 = vpop.permute.xlu0 %101
  %105 = vset.pattern.permute.xlu0 0
  %106 = vperm.xlu0 %105, %v64
  %v107 = vpop.permute.xlu0 %106
  %110 = vset.pattern.permute.xlu0 0
  %111 = vperm.xlu0 %110, %v65
  %v112 = vpop.permute.xlu0 %111
  %115 = vset.pattern.permute.xlu0 0
  %116 = vperm.xlu0 %115, %v66
  %v117 = vpop.permute.xlu0 %116
  %120 = vset.pattern.permute.xlu0 0
  %121 = vperm.xlu0 %120, %v67
  %v122 = vpop.permute.xlu0 %121
  %125 = vset.pattern.permute.xlu0 0
  %126 = vperm.xlu0 %125, %v68
  %v127 = vpop.permute.xlu0 %126
  %130 = vset.pattern.permute.xlu0 0
  %131 = vperm.xlu0 %130, %v69
  %v132 = vpop.permute.xlu0 %131
  %135 = vset.pattern.permute.xlu0 0
  %136 = vperm.xlu0 %135, %v70
  %v137 = vpop.permute.xlu0 %136
  %140 = vset.pattern.permute.xlu0 0
  %141 = vperm.xlu0 %140, %v71
  %v142 = vpop.permute.xlu0 %141
  %145 = vset.pattern.permute.xlu0 0
  %146 = vperm.xlu0 %145, %v72
  %v147 = vpop.permute.xlu0 %146
  %150 = vset.pattern.permute.xlu0 0
  %151 = vperm.xlu0 %150, %v73
  %v152 = vpop.permute.xlu0 %151
  %155 = vset.pattern.permute.xlu0 0
  %156 = vperm.xlu0 %155, %v74
  %v157 = vpop.permute.xlu0 %156
  %160 = vset.pattern.permute.xlu0 0
  %161 = vperm.xlu0 %160, %v75
  %v162 = vpop.permute.xlu0 %161
  %165 = vset.pattern.permute.xlu0 0
  %166 = vperm.xlu0 %165, %v76
  %v167 = vpop.permute.xlu0 %166
  %170 = vset.pattern.permute.xlu0 0
  %171 = vperm.xlu0 %170, %v77
  %v172 = vpop.permute.xlu0 %171
  %175 = vset.pattern.permute.xlu0 0
  %176 = vperm.xlu0 %175, %v78
  %v177 = vpop.permute.xlu0 %176
  %180 = vset.pattern.permute.xlu0 0
  %181 = vperm.xlu0 %180, %v79
  %v182 = vpop.permute.xlu0 %181
  %185 = vset.pattern.permute.xlu0 0
  %186 = vperm.xlu0 %185, %v80
  %v187 = vpop.permute.xlu0 %186
  %190 = vset.pattern.permute.xlu0 0
  %191 = vperm.xlu0 %190, %v81
  %v192 = vpop.permute.xlu0 %191
  %195 = vset.pattern.permute.xlu0 0
  %196 = vperm.xlu0 %195, %v82
  %v197 = vpop.permute.xlu0 %196
  %200 = vset.pattern.permute.xlu0 0
  %201 = vperm.xlu0 %200, %v83
  %v202 = vpop.permute.xlu0 %201
  %205 = vset.pattern.permute.xlu0 0
  %206 = vperm.xlu0 %205, %v84
  %v207 = vpop.permute.xlu0 %206
  %210 = vset.pattern.permute.xlu0 0
  %211 = vperm.xlu0 %210, %v85
  %v212 = vpop.permute.xlu0 %211
  %215 = vset.pattern.permute.xlu0 0
  %216 = vperm.xlu0 %215, %v86
  %v217 = vpop.permute.xlu0 %216
  %220 = vset.pattern.permute.xlu0 0
  %221 = vperm.xlu0 %220, %v87
  %v222 = vpop.permute.xlu0 %221
  %225 = vset.pattern.permute.xlu0 0
  %226 = vperm.xlu0 %225, %v88
  %v227 = vpop.permute.xlu0 %226
  %230 = vset.pattern.permute.xlu0 0
  %231 = vperm.xlu0 %230, %v89
  %v232 = vpop.permute.xlu0 %231
  %235 = vset.pattern.permute.xlu0 0
  %236 = vperm.xlu0 %235, %v90
  %v237 = vpop.permute.xlu0 %236
  %240 = vset.pattern.permute.xlu0 0
  %241 = vperm.xlu0 %240, %v91
  %v242 = vpop.permute.xlu0 %241
  %245 = vset.pattern.permute.xlu0 0
  %246 = vperm.xlu0 %245, %v92
  %v247 = vpop.permute.xlu0 %246
  %250 = vset.pattern.permute.xlu0 0
  %251 = vperm.xlu0 %250, %v93
  %v252 = vpop.permute.xlu0 %251
  %v286 = vunpack.c.l.b16 %v30
  %v287 = vunpack.c.l.b16 %v31
  %v288 = vunpack.c.l.b16 %v32
  %v289 = vunpack.c.l.b16 %v33
  %v290 = vunpack.c.l.b16 %v34
  %v291 = vunpack.c.l.b16 %v35
  %v292 = vunpack.c.l.b16 %v36
  %v293 = vunpack.c.l.b16 %v37
  %v294 = vunpack.c.l.b16 %v38
  %v295 = vunpack.c.l.b16 %v39
  %v296 = vunpack.c.l.b16 %v40
  %v297 = vunpack.c.l.b16 %v41
  %v298 = vunpack.c.l.b16 %v42
  %v299 = vunpack.c.l.b16 %v43
  %v300 = vunpack.c.l.b16 %v44
  %v301 = vunpack.c.l.b16 %v45
  %v302 = vunpack.c.l.b16 %v46
  %v303 = vunpack.c.l.b16 %v47
  %v304 = vunpack.c.l.b16 %v48
  %v305 = vunpack.c.l.b16 %v49
  %v306 = vunpack.c.l.b16 %v50
  %v307 = vunpack.c.l.b16 %v51
  %v308 = vunpack.c.l.b16 %v52
  %v309 = vunpack.c.l.b16 %v53
  %v310 = vunpack.c.l.b16 %v54
  %v311 = vunpack.c.l.b16 %v55
  %v312 = vunpack.c.l.b16 %v56
  %v313 = vunpack.c.l.b16 %v57
  %v314 = vunpack.c.l.b16 %v58
  %v315 = vunpack.c.l.b16 %v59
  %v316 = vunpack.c.l.b16 %v60
  %v317 = vunpack.c.l.b16 %v61
  %v318 = vpack.c.b16 %v287, %v286
  %v319 = vpack.c.b16 %v289, %v288
  %v320 = vpack.c.b16 %v291, %v290
  %v321 = vpack.c.b16 %v293, %v292
  %v322 = vpack.c.b16 %v295, %v294
  %v323 = vpack.c.b16 %v297, %v296
  %v324 = vpack.c.b16 %v299, %v298
  %v325 = vpack.c.b16 %v301, %v300
  %v326 = vpack.c.b16 %v303, %v302
  %v327 = vpack.c.b16 %v305, %v304
  %v328 = vpack.c.b16 %v307, %v306
  %v329 = vpack.c.b16 %v309, %v308
  %v330 = vpack.c.b16 %v311, %v310
  %v331 = vpack.c.b16 %v313, %v312
  %v332 = vpack.c.b16 %v315, %v314
  %v333 = vpack.c.b16 %v317, %v316
  %vm334 = vcmask 130048
  %v336 = vsel %vm334, %v318, 0
  %v339 = vsel %vm334, %v319, 0
  %v342 = vsel %vm334, %v320, 0
  %v345 = vsel %vm334, %v321, 0
  %v348 = vsel %vm334, %v322, 0
  %v351 = vsel %vm334, %v323, 0
  %v354 = vsel %vm334, %v324, 0
  %v357 = vsel %vm334, %v325, 0
  %v360 = vsel %vm334, %v326, 0
  %v363 = vsel %vm334, %v327, 0
  %v366 = vsel %vm334, %v328, 0
  %v369 = vsel %vm334, %v329, 0
  %v372 = vsel %vm334, %v330, 0
  %v375 = vsel %vm334, %v331, 0
  %v378 = vsel %vm334, %v332, 0
  %v381 = vsel %vm334, %v333, 0
  %383 = vmatpush.bf16.msra.mxu0 0
  %384 = vmatpush.bf16.msra.mxu0 0
  %385 = vmatpush.bf16.msra.mxu0 0
  %386 = vmatpush.bf16.msra.mxu0 0
  %387 = vmatpush.bf16.msra.mxu0 0
  %388 = vmatpush.bf16.msra.mxu0 0
  %389 = vmatpush.bf16.msra.mxu0 0
  %390 = vmatpush.bf16.msra.mxu0 %v29
  %391 = vmatmul.bf16.gmra.mxu0 %v336
  %v392 = vpop.f32.mrf.mxu0
  %v393 = vadd.f32 %v97, %v392
  %v394 = vpop.f32.mrf.mxu0
  %v395 = vadd.f32 %v102, %v394
  %396 = vmatmul.bf16.gmra.mxu0 %v339
  %v397 = vpop.f32.mrf.mxu0
  %v398 = vadd.f32 %v107, %v397
  %v399 = vpop.f32.mrf.mxu0
  %v400 = vadd.f32 %v112, %v399
  %401 = vmatmul.bf16.gmra.mxu0 %v342
  %v402 = vpop.f32.mrf.mxu0
  %v403 = vadd.f32 %v117, %v402
  %v404 = vpop.f32.mrf.mxu0
  %v405 = vadd.f32 %v122, %v404
  %406 = vmatmul.bf16.gmra.mxu0 %v345
  %v407 = vpop.f32.mrf.mxu0
  %v408 = vadd.f32 %v127, %v407
  %v409 = vpop.f32.mrf.mxu0
  %v410 = vadd.f32 %v132, %v409
  %411 = vmatmul.bf16.gmra.mxu0 %v348
  %v412 = vpop.f32.mrf.mxu0
  %v413 = vadd.f32 %v137, %v412
  %v414 = vpop.f32.mrf.mxu0
  %v415 = vadd.f32 %v142, %v414
  %416 = vmatmul.bf16.gmra.mxu0 %v351
  %v417 = vpop.f32.mrf.mxu0
  %v418 = vadd.f32 %v147, %v417
  %v419 = vpop.f32.mrf.mxu0
  %v420 = vadd.f32 %v152, %v419
  %421 = vmatmul.bf16.gmra.mxu0 %v354
  %v422 = vpop.f32.mrf.mxu0
  %v423 = vadd.f32 %v157, %v422
  %v424 = vpop.f32.mrf.mxu0
  %v425 = vadd.f32 %v162, %v424
  %426 = vmatmul.bf16.gmra.mxu0 %v357
  %v427 = vpop.f32.mrf.mxu0
  %v428 = vadd.f32 %v167, %v427
  %v429 = vpop.f32.mrf.mxu0
  %v430 = vadd.f32 %v172, %v429
  %431 = vmatmul.bf16.gmra.mxu0 %v360
  %v432 = vpop.f32.mrf.mxu0
  %v433 = vadd.f32 %v177, %v432
  %v434 = vpop.f32.mrf.mxu0
  %v435 = vadd.f32 %v182, %v434
  %436 = vmatmul.bf16.gmra.mxu0 %v363
  %v437 = vpop.f32.mrf.mxu0
  %v438 = vadd.f32 %v187, %v437
  %v439 = vpop.f32.mrf.mxu0
  %v440 = vadd.f32 %v192, %v439
  %441 = vmatmul.bf16.gmra.mxu0 %v366
  %v442 = vpop.f32.mrf.mxu0
  %v443 = vadd.f32 %v197, %v442
  %v444 = vpop.f32.mrf.mxu0
  %v445 = vadd.f32 %v202, %v444
  %446 = vmatmul.bf16.gmra.mxu0 %v369
  %v447 = vpop.f32.mrf.mxu0
  %v448 = vadd.f32 %v207, %v447
  %v449 = vpop.f32.mrf.mxu0
  %v450 = vadd.f32 %v212, %v449
  %451 = vmatmul.bf16.gmra.mxu0 %v372
  %v452 = vpop.f32.mrf.mxu0
  %v453 = vadd.f32 %v217, %v452
  %v454 = vpop.f32.mrf.mxu0
  %v455 = vadd.f32 %v222, %v454
  %456 = vmatmul.bf16.gmra.mxu0 %v375
  %v457 = vpop.f32.mrf.mxu0
  %v458 = vadd.f32 %v227, %v457
  %v459 = vpop.f32.mrf.mxu0
  %v460 = vadd.f32 %v232, %v459
  %461 = vmatmul.bf16.gmra.mxu0 %v378
  %v462 = vpop.f32.mrf.mxu0
  %v463 = vadd.f32 %v237, %v462
  %v464 = vpop.f32.mrf.mxu0
  %v465 = vadd.f32 %v242, %v464
  %466 = vmatmul.bf16.gmra.mxu0 %v381
  %v467 = vpop.f32.mrf.mxu0
  %v468 = vadd.f32 %v247, %v467
  %v469 = vpop.f32.mrf.mxu0
  %v470 = vadd.f32 %v252, %v469
  %471 = vdwg.mxu0
  %v472 = vmax.f32 %v393, 0.0
  %v473 = vmax.f32 %v395, 0.0
  %v474 = vmax.f32 %v398, 0.0
  %v475 = vmax.f32 %v400, 0.0
  %v476 = vmax.f32 %v403, 0.0
  %v477 = vmax.f32 %v405, 0.0
  %v478 = vmax.f32 %v408, 0.0
  %v479 = vmax.f32 %v410, 0.0
  %v480 = vmax.f32 %v413, 0.0
  %v481 = vmax.f32 %v415, 0.0
  %v482 = vmax.f32 %v418, 0.0
  %v483 = vmax.f32 %v420, 0.0
  %v484 = vmax.f32 %v423, 0.0
  %v485 = vmax.f32 %v425, 0.0
  %v486 = vmax.f32 %v428, 0.0
  %v487 = vmax.f32 %v430, 0.0
  %v488 = vmax.f32 %v433, 0.0
  %v489 = vmax.f32 %v435, 0.0
  %v490 = vmax.f32 %v438, 0.0
  %v491 = vmax.f32 %v440, 0.0
  %v492 = vmax.f32 %v443, 0.0
  %v493 = vmax.f32 %v445, 0.0
  %v494 = vmax.f32 %v448, 0.0
  %v495 = vmax.f32 %v450, 0.0
  %v496 = vmax.f32 %v453, 0.0
  %v497 = vmax.f32 %v455, 0.0
  %v498 = vmax.f32 %v458, 0.0
  %v499 = vmax.f32 %v460, 0.0
  %v500 = vmax.f32 %v463, 0.0
  %v501 = vmax.f32 %v465, 0.0
  %v502 = vmax.f32 %v468, 0.0
  %v503 = vmax.f32 %v470, 0.0
  %v504 = vld [vmem:[%s3] sm:$0xff]
  %v505 = vld [vmem:[%s3 + $0x8] sm:$0xff]
  %v506 = vld [vmem:[%s3 + $0x10] sm:$0xff]
  %v507 = vld [vmem:[%s3 + $0x18] sm:$0xff]
  %v508 = vld [vmem:[%s3 + $0x20] sm:$0xff]
  %v509 = vld [vmem:[%s3 + $0x28] sm:$0xff]
  %v510 = vld [vmem:[%s3 + $0x30] sm:$0xff]
  %v511 = vld [vmem:[%s3 + $0x38] sm:$0xff]
  %v512 = vld [vmem:[%s3 + $0x40] sm:$0xff]
  %v513 = vld [vmem:[%s3 + $0x48] sm:$0xff]
  %v514 = vld [vmem:[%s3 + $0x50] sm:$0xff]
  %v515 = vld [vmem:[%s3 + $0x58] sm:$0xff]
  %v516 = vld [vmem:[%s3 + $0x60] sm:$0xff]
  %v517 = vld [vmem:[%s3 + $0x68] sm:$0xff]
  %v518 = vld [vmem:[%s3 + $0x70] sm:$0xff]
  %v519 = vld [vmem:[%s3 + $0x78] sm:$0xff]
  %v520 = vld [vmem:[%s3 + $0x80] sm:$0xff]
  %v521 = vld [vmem:[%s3 + $0x88] sm:$0xff]
  %v522 = vld [vmem:[%s3 + $0x90] sm:$0xff]
  %v523 = vld [vmem:[%s3 + $0x98] sm:$0xff]
  %v524 = vld [vmem:[%s3 + $0xa0] sm:$0xff]
  %v525 = vld [vmem:[%s3 + $0xa8] sm:$0xff]
  %v526 = vld [vmem:[%s3 + $0xb0] sm:$0xff]
  %v527 = vld [vmem:[%s3 + $0xb8] sm:$0xff]
  %v528 = vld [vmem:[%s3 + $0xc0] sm:$0xff]
  %v529 = vld [vmem:[%s3 + $0xc8] sm:$0xff]
  %v530 = vld [vmem:[%s3 + $0xd0] sm:$0xff]
  %v531 = vld [vmem:[%s3 + $0xd8] sm:$0xff]
  %v532 = vld [vmem:[%s3 + $0xe0] sm:$0xff]
  %v533 = vld [vmem:[%s3 + $0xe8] sm:$0xff]
  %v534 = vld [vmem:[%s3 + $0xf0] sm:$0xff]
  %v535 = vld [vmem:[%s3 + $0xf8] sm:$0xff]
  %v536 = vpack.c.bf16 %v473, %v472
  %v537 = vpack.c.bf16 %v475, %v474
  %v538 = vpack.c.bf16 %v477, %v476
  %v539 = vpack.c.bf16 %v479, %v478
  %v540 = vpack.c.bf16 %v481, %v480
  %v541 = vpack.c.bf16 %v483, %v482
  %v542 = vpack.c.bf16 %v485, %v484
  %v543 = vpack.c.bf16 %v487, %v486
  %v544 = vpack.c.bf16 %v489, %v488
  %v545 = vpack.c.bf16 %v491, %v490
  %v546 = vpack.c.bf16 %v493, %v492
  %v547 = vpack.c.bf16 %v495, %v494
  %v548 = vpack.c.bf16 %v497, %v496
  %v549 = vpack.c.bf16 %v499, %v498
  %v550 = vpack.c.bf16 %v501, %v500
  %v551 = vpack.c.bf16 %v503, %v502
  %v552 = vld [vmem:[%s4] sm:$0xff]
  %v553 = vld [vmem:[%s4 + $0x8] sm:$0xff]
  %v554 = vld [vmem:[%s4 + $0x10] sm:$0xff]
  %v555 = vld [vmem:[%s4 + $0x18] sm:$0xff]
  %v556 = vld [vmem:[%s4 + $0x20] sm:$0xff]
  %v557 = vld [vmem:[%s4 + $0x28] sm:$0xff]
  %v558 = vld [vmem:[%s4 + $0x30] sm:$0xff]
  %v559 = vld [vmem:[%s4 + $0x38] sm:$0xff]
  %v560 = vld [vmem:[%s4 + $0x40] sm:$0xff]
  %v561 = vld [vmem:[%s4 + $0x48] sm:$0xff]
  %v562 = vld [vmem:[%s4 + $0x50] sm:$0xff]
  %v563 = vld [vmem:[%s4 + $0x58] sm:$0xff]
  %v564 = vld [vmem:[%s4 + $0x60] sm:$0xff]
  %v565 = vld [vmem:[%s4 + $0x68] sm:$0xff]
  %v566 = vld [vmem:[%s4 + $0x70] sm:$0xff]
  %v567 = vld [vmem:[%s4 + $0x78] sm:$0xff]
  %v568 = vld [vmem:[%s4 + $0x80] sm:$0xff]
  %v569 = vld [vmem:[%s4 + $0x88] sm:$0xff]
  %v570 = vld [vmem:[%s4 + $0x90] sm:$0xff]
  %v571 = vld [vmem:[%s4 + $0x98] sm:$0xff]
  %v572 = vld [vmem:[%s4 + $0xa0] sm:$0xff]
  %v573 = vld [vmem:[%s4 + $0xa8] sm:$0xff]
  %v574 = vld [vmem:[%s4 + $0xb0] sm:$0xff]
  %v575 = vld [vmem:[%s4 + $0xb8] sm:$0xff]
  %v576 = vld [vmem:[%s4 + $0xc0] sm:$0xff]
  %v577 = vld [vmem:[%s4 + $0xc8] sm:$0xff]
  %v578 = vld [vmem:[%s4 + $0xd0] sm:$0xff]
  %v579 = vld [vmem:[%s4 + $0xd8] sm:$0xff]
  %v580 = vld [vmem:[%s4 + $0xe0] sm:$0xff]
  %v581 = vld [vmem:[%s4 + $0xe8] sm:$0xff]
  %v582 = vld [vmem:[%s4 + $0xf0] sm:$0xff]
  %v583 = vld [vmem:[%s4 + $0xf8] sm:$0xff]
  %585 = vset.pattern.permute.xlu0 0
  %586 = vperm.xlu0 %585, %v552
  %v587 = vpop.permute.xlu0 %586
  %590 = vset.pattern.permute.xlu0 0
  %591 = vperm.xlu0 %590, %v553
  %v592 = vpop.permute.xlu0 %591
  %595 = vset.pattern.permute.xlu0 0
  %596 = vperm.xlu0 %595, %v554
  %v597 = vpop.permute.xlu0 %596
  %600 = vset.pattern.permute.xlu0 0
  %601 = vperm.xlu0 %600, %v555
  %v602 = vpop.permute.xlu0 %601
  %605 = vset.pattern.permute.xlu0 0
  %606 = vperm.xlu0 %605, %v556
  %v607 = vpop.permute.xlu0 %606
  %610 = vset.pattern.permute.xlu0 0
  %611 = vperm.xlu0 %610, %v557
  %v612 = vpop.permute.xlu0 %611
  %615 = vset.pattern.permute.xlu0 0
  %616 = vperm.xlu0 %615, %v558
  %v617 = vpop.permute.xlu0 %616
  %620 = vset.pattern.permute.xlu0 0
  %621 = vperm.xlu0 %620, %v559
  %v622 = vpop.permute.xlu0 %621
  %625 = vset.pattern.permute.xlu0 0
  %626 = vperm.xlu0 %625, %v560
  %v627 = vpop.permute.xlu0 %626
  %630 = vset.pattern.permute.xlu0 0
  %631 = vperm.xlu0 %630, %v561
  %v632 = vpop.permute.xlu0 %631
  %635 = vset.pattern.permute.xlu0 0
  %636 = vperm.xlu0 %635, %v562
  %v637 = vpop.permute.xlu0 %636
  %640 = vset.pattern.permute.xlu0 0
  %641 = vperm.xlu0 %640, %v563
  %v642 = vpop.permute.xlu0 %641
  %645 = vset.pattern.permute.xlu0 0
  %646 = vperm.xlu0 %645, %v564
  %v647 = vpop.permute.xlu0 %646
  %650 = vset.pattern.permute.xlu0 0
  %651 = vperm.xlu0 %650, %v565
  %v652 = vpop.permute.xlu0 %651
  %655 = vset.pattern.permute.xlu0 0
  %656 = vperm.xlu0 %655, %v566
  %v657 = vpop.permute.xlu0 %656
  %660 = vset.pattern.permute.xlu0 0
  %661 = vperm.xlu0 %660, %v567
  %v662 = vpop.permute.xlu0 %661
  %665 = vset.pattern.permute.xlu0 0
  %666 = vperm.xlu0 %665, %v568
  %v667 = vpop.permute.xlu0 %666
  %670 = vset.pattern.permute.xlu0 0
  %671 = vperm.xlu0 %670, %v569
  %v672 = vpop.permute.xlu0 %671
  %675 = vset.pattern.permute.xlu0 0
  %676 = vperm.xlu0 %675, %v570
  %v677 = vpop.permute.xlu0 %676
  %680 = vset.pattern.permute.xlu0 0
  %681 = vperm.xlu0 %680, %v571
  %v682 = vpop.permute.xlu0 %681
  %685 = vset.pattern.permute.xlu0 0
  %686 = vperm.xlu0 %685, %v572
  %v687 = vpop.permute.xlu0 %686
  %690 = vset.pattern.permute.xlu0 0
  %691 = vperm.xlu0 %690, %v573
  %v692 = vpop.permute.xlu0 %691
  %695 = vset.pattern.permute.xlu0 0
  %696 = vperm.xlu0 %695, %v574
  %v697 = vpop.permute.xlu0 %696
  %700 = vset.pattern.permute.xlu0 0
  %701 = vperm.xlu0 %700, %v575
  %v702 = vpop.permute.xlu0 %701
  %705 = vset.pattern.permute.xlu0 0
  %706 = vperm.xlu0 %705, %v576
  %v707 = vpop.permute.xlu0 %706
  %710 = vset.pattern.permute.xlu0 0
  %711 = vperm.xlu0 %710, %v577
  %v712 = vpop.permute.xlu0 %711
  %715 = vset.pattern.permute.xlu0 0
  %716 = vperm.xlu0 %715, %v578
  %v717 = vpop.permute.xlu0 %716
  %720 = vset.pattern.permute.xlu0 0
  %721 = vperm.xlu0 %720, %v579
  %v722 = vpop.permute.xlu0 %721
  %725 = vset.pattern.permute.xlu0 0
  %726 = vperm.xlu0 %725, %v580
  %v727 = vpop.permute.xlu0 %726
  %730 = vset.pattern.permute.xlu0 0
  %731 = vperm.xlu0 %730, %v581
  %v732 = vpop.permute.xlu0 %731
  %735 = vset.pattern.permute.xlu0 0
  %736 = vperm.xlu0 %735, %v582
  %v737 = vpop.permute.xlu0 %736
  %740 = vset.pattern.permute.xlu0 0
  %741 = vperm.xlu0 %740, %v583
  %v742 = vpop.permute.xlu0 %741
  %v776 = vunpack.c.l.b16 %v504
  %v777 = vunpack.c.h.b16 %v504
  %v778 = vunpack.c.l.b16 %v505
  %v779 = vunpack.c.h.b16 %v505
  %v780 = vunpack.c.l.b16 %v506
  %v781 = vunpack.c.h.b16 %v506
  %v782 = vunpack.c.l.b16 %v507
  %v783 = vunpack.c.h.b16 %v507
  %v784 = vunpack.c.l.b16 %v508
  %v785 = vunpack.c.h.b16 %v508
  %v786 = vunpack.c.l.b16 %v509
  %v787 = vunpack.c.h.b16 %v509
  %v788 = vunpack.c.l.b16 %v510
  %v789 = vunpack.c.h.b16 %v510
  %v790 = vunpack.c.l.b16 %v511
  %v791 = vunpack.c.h.b16 %v511
  %v792 = vunpack.c.l.b16 %v512
  %v793 = vunpack.c.h.b16 %v512
  %v794 = vunpack.c.l.b16 %v513
  %v795 = vunpack.c.h.b16 %v513
  %v796 = vunpack.c.l.b16 %v514
  %v797 = vunpack.c.h.b16 %v514
  %v798 = vunpack.c.l.b16 %v515
  %v799 = vunpack.c.h.b16 %v515
  %v800 = vunpack.c.l.b16 %v516
  %v801 = vunpack.c.h.b16 %v516
  %v802 = vunpack.c.l.b16 %v517
  %v803 = vunpack.c.h.b16 %v517
  %v804 = vunpack.c.l.b16 %v518
  %v805 = vunpack.c.h.b16 %v518
  %v806 = vunpack.c.l.b16 %v519
  %v807 = vunpack.c.h.b16 %v519
  %v808 = vunpack.c.l.b16 %v520
  %v809 = vunpack.c.h.b16 %v520
  %v810 = vunpack.c.l.b16 %v521
  %v811 = vunpack.c.h.b16 %v521
  %v812 = vunpack.c.l.b16 %v522
  %v813 = vunpack.c.h.b16 %v522
  %v814 = vunpack.c.l.b16 %v523
  %v815 = vunpack.c.h.b16 %v523
  %v816 = vunpack.c.l.b16 %v524
  %v817 = vunpack.c.h.b16 %v524
  %v818 = vunpack.c.l.b16 %v525
  %v819 = vunpack.c.h.b16 %v525
  %v820 = vunpack.c.l.b16 %v526
  %v821 = vunpack.c.h.b16 %v526
  %v822 = vunpack.c.l.b16 %v527
  %v823 = vunpack.c.h.b16 %v527
  %v824 = vunpack.c.l.b16 %v528
  %v825 = vunpack.c.h.b16 %v528
  %v826 = vunpack.c.l.b16 %v529
  %v827 = vunpack.c.h.b16 %v529
  %v828 = vunpack.c.l.b16 %v530
  %v829 = vunpack.c.h.b16 %v530
  %v830 = vunpack.c.l.b16 %v531
  %v831 = vunpack.c.h.b16 %v531
  %v832 = vunpack.c.l.b16 %v532
  %v833 = vunpack.c.h.b16 %v532
  %v834 = vunpack.c.l.b16 %v533
  %v835 = vunpack.c.h.b16 %v533
  %v836 = vunpack.c.l.b16 %v534
  %v837 = vunpack.c.h.b16 %v534
  %v838 = vunpack.c.l.b16 %v535
  %v839 = vunpack.c.h.b16 %v535
  %v840 = vpack.c.b16 %v778, %v776
  %v841 = vpack.c.b16 %v779, %v777
  %v842 = vpack.c.b16 %v782, %v780
  %v843 = vpack.c.b16 %v783, %v781
  %v844 = vpack.c.b16 %v786, %v784
  %v845 = vpack.c.b16 %v787, %v785
  %v846 = vpack.c.b16 %v790, %v788
  %v847 = vpack.c.b16 %v791, %v789
  %v848 = vpack.c.b16 %v794, %v792
  %v849 = vpack.c.b16 %v795, %v793
  %v850 = vpack.c.b16 %v798, %v796
  %v851 = vpack.c.b16 %v799, %v797
  %v852 = vpack.c.b16 %v802, %v800
  %v853 = vpack.c.b16 %v803, %v801
  %v854 = vpack.c.b16 %v806, %v804
  %v855 = vpack.c.b16 %v807, %v805
  %v856 = vpack.c.b16 %v810, %v808
  %v857 = vpack.c.b16 %v811, %v809
  %v858 = vpack.c.b16 %v814, %v812
  %v859 = vpack.c.b16 %v815, %v813
  %v860 = vpack.c.b16 %v818, %v816
  %v861 = vpack.c.b16 %v819, %v817
  %v862 = vpack.c.b16 %v822, %v820
  %v863 = vpack.c.b16 %v823, %v821
  %v864 = vpack.c.b16 %v826, %v824
  %v865 = vpack.c.b16 %v827, %v825
  %v866 = vpack.c.b16 %v830, %v828
  %v867 = vpack.c.b16 %v831, %v829
  %v868 = vpack.c.b16 %v834, %v832
  %v869 = vpack.c.b16 %v835, %v833
  %v870 = vpack.c.b16 %v838, %v836
  %v871 = vpack.c.b16 %v839, %v837
  %904 = vmatpush.bf16.msra.mxu0 %v543
  %905 = vmatpush.bf16.msra.mxu0 %v542
  %906 = vmatpush.bf16.msra.mxu0 %v541
  %907 = vmatpush.bf16.msra.mxu0 %v540
  %908 = vmatpush.bf16.msra.mxu0 %v539
  %909 = vmatpush.bf16.msra.mxu0 %v538
  %910 = vmatpush.bf16.msra.mxu0 %v537
  %911 = vmatpush.bf16.msra.mxu0 %v536
  %912 = vmatmul.bf16.gmra.mxu0 %v840
  %v913 = vpop.f32.mrf.mxu0
  %v914 = vadd.f32 %v587, %v913
  %v915 = vpop.f32.mrf.mxu0
  %v916 = vadd.f32 %v592, %v915
  %917 = vmatmul.bf16.gmra.mxu0 %v842
  %v918 = vpop.f32.mrf.mxu0
  %v919 = vadd.f32 %v597, %v918
  %v920 = vpop.f32.mrf.mxu0
  %v921 = vadd.f32 %v602, %v920
  %922 = vmatmul.bf16.gmra.mxu0 %v844
  %v923 = vpop.f32.mrf.mxu0
  %v924 = vadd.f32 %v607, %v923
  %v925 = vpop.f32.mrf.mxu0
  %v926 = vadd.f32 %v612, %v925
  %927 = vmatmul.bf16.gmra.mxu0 %v846
  %v928 = vpop.f32.mrf.mxu0
  %v929 = vadd.f32 %v617, %v928
  %v930 = vpop.f32.mrf.mxu0
  %v931 = vadd.f32 %v622, %v930
  %932 = vmatmul.bf16.gmra.mxu0 %v848
  %v933 = vpop.f32.mrf.mxu0
  %v934 = vadd.f32 %v627, %v933
  %v935 = vpop.f32.mrf.mxu0
  %v936 = vadd.f32 %v632, %v935
  %937 = vmatmul.bf16.gmra.mxu0 %v850
  %v938 = vpop.f32.mrf.mxu0
  %v939 = vadd.f32 %v637, %v938
  %v940 = vpop.f32.mrf.mxu0
  %v941 = vadd.f32 %v642, %v940
  %942 = vmatmul.bf16.gmra.mxu0 %v852
  %v943 = vpop.f32.mrf.mxu0
  %v944 = vadd.f32 %v647, %v943
  %v945 = vpop.f32.mrf.mxu0
  %v946 = vadd.f32 %v652, %v945
  %947 = vmatmul.bf16.gmra.mxu0 %v854
  %v948 = vpop.f32.mrf.mxu0
  %v949 = vadd.f32 %v657, %v948
  %v950 = vpop.f32.mrf.mxu0
  %v951 = vadd.f32 %v662, %v950
  %952 = vmatmul.bf16.gmra.mxu0 %v856
  %v953 = vpop.f32.mrf.mxu0
  %v954 = vadd.f32 %v667, %v953
  %v955 = vpop.f32.mrf.mxu0
  %v956 = vadd.f32 %v672, %v955
  %957 = vmatmul.bf16.gmra.mxu0 %v858
  %v958 = vpop.f32.mrf.mxu0
  %v959 = vadd.f32 %v677, %v958
  %v960 = vpop.f32.mrf.mxu0
  %v961 = vadd.f32 %v682, %v960
  %962 = vmatmul.bf16.gmra.mxu0 %v860
  %v963 = vpop.f32.mrf.mxu0
  %v964 = vadd.f32 %v687, %v963
  %v965 = vpop.f32.mrf.mxu0
  %v966 = vadd.f32 %v692, %v965
  %967 = vmatmul.bf16.gmra.mxu0 %v862
  %v968 = vpop.f32.mrf.mxu0
  %v969 = vadd.f32 %v697, %v968
  %v970 = vpop.f32.mrf.mxu0
  %v971 = vadd.f32 %v702, %v970
  %972 = vmatmul.bf16.gmra.mxu0 %v864
  %v973 = vpop.f32.mrf.mxu0
  %v974 = vadd.f32 %v707, %v973
  %v975 = vpop.f32.mrf.mxu0
  %v976 = vadd.f32 %v712, %v975
  %977 = vmatmul.bf16.gmra.mxu0 %v866
  %v978 = vpop.f32.mrf.mxu0
  %v979 = vadd.f32 %v717, %v978
  %v980 = vpop.f32.mrf.mxu0
  %v981 = vadd.f32 %v722, %v980
  %982 = vmatmul.bf16.gmra.mxu0 %v868
  %v983 = vpop.f32.mrf.mxu0
  %v984 = vadd.f32 %v727, %v983
  %v985 = vpop.f32.mrf.mxu0
  %v986 = vadd.f32 %v732, %v985
  %987 = vmatmul.bf16.gmra.mxu0 %v870
  %v988 = vpop.f32.mrf.mxu0
  %v989 = vadd.f32 %v737, %v988
  %v990 = vpop.f32.mrf.mxu0
  %v991 = vadd.f32 %v742, %v990
  %992 = vdwg.mxu0
  %993 = vmatpush.bf16.msra.mxu0 %v551
  %994 = vmatpush.bf16.msra.mxu0 %v550
  %995 = vmatpush.bf16.msra.mxu0 %v549
  %996 = vmatpush.bf16.msra.mxu0 %v548
  %997 = vmatpush.bf16.msra.mxu0 %v547
  %998 = vmatpush.bf16.msra.mxu0 %v546
  %999 = vmatpush.bf16.msra.mxu0 %v545
  %1000 = vmatpush.bf16.msra.mxu0 %v544
  %1001 = vmatmul.bf16.gmra.mxu0 %v841
  %v1002 = vpop.f32.mrf.mxu0
  %v1003 = vadd.f32 %v914, %v1002
  %v1004 = vpop.f32.mrf.mxu0
  %v1005 = vadd.f32 %v916, %v1004
  %1006 = vmatmul.bf16.gmra.mxu0 %v843
  %v1007 = vpop.f32.mrf.mxu0
  %v1008 = vadd.f32 %v919, %v1007
  %v1009 = vpop.f32.mrf.mxu0
  %v1010 = vadd.f32 %v921, %v1009
  %1011 = vmatmul.bf16.gmra.mxu0 %v845
  %v1012 = vpop.f32.mrf.mxu0
  %v1013 = vadd.f32 %v924, %v1012
  %v1014 = vpop.f32.mrf.mxu0
  %v1015 = vadd.f32 %v926, %v1014
  %1016 = vmatmul.bf16.gmra.mxu0 %v847
  %v1017 = vpop.f32.mrf.mxu0
  %v1018 = vadd.f32 %v929, %v1017
  %v1019 = vpop.f32.mrf.mxu0
  %v1020 = vadd.f32 %v931, %v1019
  %1021 = vmatmul.bf16.gmra.mxu0 %v849
  %v1022 = vpop.f32.mrf.mxu0
  %v1023 = vadd.f32 %v934, %v1022
  %v1024 = vpop.f32.mrf.mxu0
  %v1025 = vadd.f32 %v936, %v1024
  %1026 = vmatmul.bf16.gmra.mxu0 %v851
  %v1027 = vpop.f32.mrf.mxu0
  %v1028 = vadd.f32 %v939, %v1027
  %v1029 = vpop.f32.mrf.mxu0
  %v1030 = vadd.f32 %v941, %v1029
  %1031 = vmatmul.bf16.gmra.mxu0 %v853
  %v1032 = vpop.f32.mrf.mxu0
  %v1033 = vadd.f32 %v944, %v1032
  %v1034 = vpop.f32.mrf.mxu0
  %v1035 = vadd.f32 %v946, %v1034
  %1036 = vmatmul.bf16.gmra.mxu0 %v855
  %v1037 = vpop.f32.mrf.mxu0
  %v1038 = vadd.f32 %v949, %v1037
  %v1039 = vpop.f32.mrf.mxu0
  %v1040 = vadd.f32 %v951, %v1039
  %1041 = vmatmul.bf16.gmra.mxu0 %v857
  %v1042 = vpop.f32.mrf.mxu0
  %v1043 = vadd.f32 %v954, %v1042
  %v1044 = vpop.f32.mrf.mxu0
  %v1045 = vadd.f32 %v956, %v1044
  %1046 = vmatmul.bf16.gmra.mxu0 %v859
  %v1047 = vpop.f32.mrf.mxu0
  %v1048 = vadd.f32 %v959, %v1047
  %v1049 = vpop.f32.mrf.mxu0
  %v1050 = vadd.f32 %v961, %v1049
  %1051 = vmatmul.bf16.gmra.mxu0 %v861
  %v1052 = vpop.f32.mrf.mxu0
  %v1053 = vadd.f32 %v964, %v1052
  %v1054 = vpop.f32.mrf.mxu0
  %v1055 = vadd.f32 %v966, %v1054
  %1056 = vmatmul.bf16.gmra.mxu0 %v863
  %v1057 = vpop.f32.mrf.mxu0
  %v1058 = vadd.f32 %v969, %v1057
  %v1059 = vpop.f32.mrf.mxu0
  %v1060 = vadd.f32 %v971, %v1059
  %1061 = vmatmul.bf16.gmra.mxu0 %v865
  %v1062 = vpop.f32.mrf.mxu0
  %v1063 = vadd.f32 %v974, %v1062
  %v1064 = vpop.f32.mrf.mxu0
  %v1065 = vadd.f32 %v976, %v1064
  %1066 = vmatmul.bf16.gmra.mxu0 %v867
  %v1067 = vpop.f32.mrf.mxu0
  %v1068 = vadd.f32 %v979, %v1067
  %v1069 = vpop.f32.mrf.mxu0
  %v1070 = vadd.f32 %v981, %v1069
  %1071 = vmatmul.bf16.gmra.mxu0 %v869
  %v1072 = vpop.f32.mrf.mxu0
  %v1073 = vadd.f32 %v984, %v1072
  %v1074 = vpop.f32.mrf.mxu0
  %v1075 = vadd.f32 %v986, %v1074
  %1076 = vmatmul.bf16.gmra.mxu0 %v871
  %v1077 = vpop.f32.mrf.mxu0
  %v1078 = vadd.f32 %v989, %v1077
  %v1079 = vpop.f32.mrf.mxu0
  %v1080 = vadd.f32 %v991, %v1079
  %1081 = vdwg.mxu0
  %v1082 = vmax.f32 %v1003, 0.0
  %v1083 = vmax.f32 %v1005, 0.0
  %v1084 = vmax.f32 %v1008, 0.0
  %v1085 = vmax.f32 %v1010, 0.0
  %v1086 = vmax.f32 %v1013, 0.0
  %v1087 = vmax.f32 %v1015, 0.0
  %v1088 = vmax.f32 %v1018, 0.0
  %v1089 = vmax.f32 %v1020, 0.0
  %v1090 = vmax.f32 %v1023, 0.0
  %v1091 = vmax.f32 %v1025, 0.0
  %v1092 = vmax.f32 %v1028, 0.0
  %v1093 = vmax.f32 %v1030, 0.0
  %v1094 = vmax.f32 %v1033, 0.0
  %v1095 = vmax.f32 %v1035, 0.0
  %v1096 = vmax.f32 %v1038, 0.0
  %v1097 = vmax.f32 %v1040, 0.0
  %v1098 = vmax.f32 %v1043, 0.0
  %v1099 = vmax.f32 %v1045, 0.0
  %v1100 = vmax.f32 %v1048, 0.0
  %v1101 = vmax.f32 %v1050, 0.0
  %v1102 = vmax.f32 %v1053, 0.0
  %v1103 = vmax.f32 %v1055, 0.0
  %v1104 = vmax.f32 %v1058, 0.0
  %v1105 = vmax.f32 %v1060, 0.0
  %v1106 = vmax.f32 %v1063, 0.0
  %v1107 = vmax.f32 %v1065, 0.0
  %v1108 = vmax.f32 %v1068, 0.0
  %v1109 = vmax.f32 %v1070, 0.0
  %v1110 = vmax.f32 %v1073, 0.0
  %v1111 = vmax.f32 %v1075, 0.0
  %v1112 = vmax.f32 %v1078, 0.0
  %v1113 = vmax.f32 %v1080, 0.0
  %v1114 = vld [vmem:[%s5] sm:$0xff]
  %v1115 = vpack.c.bf16 %v1083, %v1082
  %v1116 = vpack.c.bf16 %v1085, %v1084
  %v1117 = vpack.c.bf16 %v1087, %v1086
  %v1118 = vpack.c.bf16 %v1089, %v1088
  %v1119 = vpack.c.bf16 %v1091, %v1090
  %v1120 = vpack.c.bf16 %v1093, %v1092
  %v1121 = vpack.c.bf16 %v1095, %v1094
  %v1122 = vpack.c.bf16 %v1097, %v1096
  %v1123 = vpack.c.bf16 %v1099, %v1098
  %v1124 = vpack.c.bf16 %v1101, %v1100
  %v1125 = vpack.c.bf16 %v1103, %v1102
  %v1126 = vpack.c.bf16 %v1105, %v1104
  %v1127 = vpack.c.bf16 %v1107, %v1106
  %v1128 = vpack.c.bf16 %v1109, %v1108
  %v1129 = vpack.c.bf16 %v1111, %v1110
  %v1130 = vpack.c.bf16 %v1113, %v1112
  %v1131 = vld [vmem:[%s6] sm:$0xff]
  %1133 = vset.pattern.permute.xlu0 0
  %1134 = vperm.xlu0 %1133, %v1131
  %v1135 = vpop.permute.xlu0 %1134
  %v1138 = vunpack.c.l.b16 %v1114
  %v1139 = vunpack.c.h.b16 %v1114
  %v1140 = vpack.c.b16 %v1138, %v1138
  %v1141 = vpack.c.b16 %v1139, %v1139
  %1144 = vmatpush.bf16.msra.mxu0 %v1122
  %1145 = vmatpush.bf16.msra.mxu0 %v1121
  %1146 = vmatpush.bf16.msra.mxu0 %v1120
  %1147 = vmatpush.bf16.msra.mxu0 %v1119
  %1148 = vmatpush.bf16.msra.mxu0 %v1118
  %1149 = vmatpush.bf16.msra.mxu0 %v1117
  %1150 = vmatpush.bf16.msra.mxu0 %v1116
  %1151 = vmatpush.bf16.msra.mxu0 %v1115
  %1152 = vmatmul.bf16.gmra.mxu0 %v1140
  %v1153 = vpop.f32.mrf.mxu0
  %v1154 = vadd.f32 %v1135, %v1153
  %v1155 = vpop.f32.mrf.mxu0
  %1156 = vdwg.mxu0
  %1157 = vmatpush.bf16.msra.mxu0 %v1130
  %1158 = vmatpush.bf16.msra.mxu0 %v1129
  %1159 = vmatpush.bf16.msra.mxu0 %v1128
  %1160 = vmatpush.bf16.msra.mxu0 %v1127
  %1161 = vmatpush.bf16.msra.mxu0 %v1126
  %1162 = vmatpush.bf16.msra.mxu0 %v1125
  %1163 = vmatpush.bf16.msra.mxu0 %v1124
  %1164 = vmatpush.bf16.msra.mxu0 %v1123
  %1165 = vmatmul.bf16.gmra.mxu0 %v1141
  %v1166 = vpop.f32.mrf.mxu0
  %v1167 = vadd.f32 %v1154, %v1166
  %v1168 = vpop.f32.mrf.mxu0
  %1169 = vdwg.mxu0
  %vm1170 = vcmask 15360
  %1171 = vst.msk [vmem:[%s7] sm:$0xff] %vm1170, %v1167
  // Predicated region
  $region30: #{net_forward.1} parent=0 // pred_check
    _
  $region31: #{net_forward.1} parent=0 // pred_check_branch
    %1173 = sbr.rel (0) target = $region33
  $region32: #{net_forward.1} parent=0 // pred_region
    _
  $region33: #{net_forward.1} parent=0 // pred_fallthru
    _
  // Predicated region
  $region34: #{net_forward.1} parent=0 // pred_check
    _
  $region35: #{net_forward.1} parent=0 // pred_check_branch
    %1175 = sbr.rel (0) target = $region37
  $region36: #{net_forward.1} parent=0 // pred_region
    _
  $region37: #{net_forward.1} parent=0 // pred_fallthru
    _

</llo_original>
